<compile_context>
chip_gen: v7x
topology: tpu7x:2x2x1
jax: 0.10.0
libtpu: 0.0.40
codegen_flags: <defaults>
</compile_context>

<pallas_src>
import jax
import jax.numpy as jnp
from jax.experimental import pallas as pl
from jax.experimental.pallas import tpu as pltpu


def lstm_kernel(x_ref, wih_ref, whh_ref, b_ref, h_out_ref):
    """Whole-sequence LSTM in one kernel invocation.

    x_ref:   (B, T, I)   batch_first input
    wih_ref: (I, 4H)     W_ih^T
    whh_ref: (H, 4H)     W_hh^T
    b_ref:   (1, 4H)     b_ih + b_hh
    h_out_ref: (B, H)    last hidden state
    """
    B, T, I = x_ref.shape
    H = whh_ref.shape[0]
    G = 4 * H

    # One fused MXU call for the input projection of ALL timesteps (+ bias,
    # added once rather than per step):  (B*T, I) @ (I, 4H) -> (B, T, 4H).
    xg = jnp.dot(x_ref[...].reshape(B * T, I), wih_ref[...],
                 preferred_element_type=jnp.float32)
    xg = xg.reshape(B, T, G) + b_ref[...].reshape(1, 1, G)

    w_hh = whh_ref[...]
    h = jnp.zeros((B, H), jnp.float32)
    c = jnp.zeros((B, H), jnp.float32)

    # Sequential recurrence; T is a trace-time constant, so this is a fully
    # unrolled static loop (for very long T, chunk T over a grid axis instead).
    # PyTorch gate order: input, forget, cell(g), output.
    for t in range(T):
        gates = xg[:, t, :] + jnp.dot(h, w_hh,
                                      preferred_element_type=jnp.float32)
        i_g = jax.nn.sigmoid(gates[:, 0:H])
        f_g = jax.nn.sigmoid(gates[:, H:2 * H])
        g_g = jnp.tanh(gates[:, 2 * H:3 * H])
        o_g = jax.nn.sigmoid(gates[:, 3 * H:4 * H])
        c = f_g * c + i_g * g_g
        h = o_g * jnp.tanh(c)

    h_out_ref[...] = h


def simple_rnn_forward(x_btI, params):
    """x_btI: (B, T, I) float32 (PyTorch batch_first). Returns (B,)."""
    B, T, I = x_btI.shape
    H = params["w_hh"].shape[0]

    h_last = pl.pallas_call(
        lstm_kernel,
        out_shape=jax.ShapeDtypeStruct((B, H), jnp.float32),
        grid=(1,),
        in_specs=[
            pl.BlockSpec((B, T, I), lambda i: (0, 0, 0)),      # full x, one DMA
            pl.BlockSpec((I, 4 * H), lambda i: (0, 0)),        # W_ih^T
            pl.BlockSpec((H, 4 * H), lambda i: (0, 0)),        # W_hh^T
            pl.BlockSpec((1, 4 * H), lambda i: (0, 0)),        # b_ih + b_hh
        ],
        out_specs=pl.BlockSpec((B, H), lambda i: (0, 0)),
        compiler_params=pltpu.CompilerParams(
            dimension_semantics=("arbitrary",)),
    )(x_btI, params["w_ih"], params["w_hh"], params["bias"])

    # Tiny FC head on the last hidden state, done in the wrapper (perf review):
    # (B, H) @ (H, 1) + (1, 1) -> (B, 1) -> squeeze -> (B,)
    out = h_last @ params["w_fc"] + params["b_fc"]
    return out[:, 0]


def init_params(key, input_size, hidden_size):
    """Deterministic init mirroring nn.LSTM/nn.Linear shapes (uniform +-1/sqrt(H))."""
    k = 1.0 / jnp.sqrt(hidden_size)
    ks = jax.random.split(key, 6)
    w_ih = jax.random.uniform(ks[0], (4 * hidden_size, input_size), jnp.float32, -k, k)
    w_hh = jax.random.uniform(ks[1], (4 * hidden_size, hidden_size), jnp.float32, -k, k)
    b_ih = jax.random.uniform(ks[2], (4 * hidden_size,), jnp.float32, -k, k)
    b_hh = jax.random.uniform(ks[3], (4 * hidden_size,), jnp.float32, -k, k)
    w_fc = jax.random.uniform(ks[4], (1, hidden_size), jnp.float32, -k, k)
    b_fc = jax.random.uniform(ks[5], (1,), jnp.float32, -k, k)
    return {
        "w_ih": w_ih.T,                                # (I, 4H)
        "w_hh": w_hh.T,                                # (H, 4H)
        "bias": (b_ih + b_hh).reshape(1, 4 * hidden_size),
        "w_fc": w_fc.T,                                # (H, 1)
        "b_fc": b_fc.reshape(1, 1),
    }


def reference_forward(x_btI, params):
    """Pure-JAX reference (lax.scan LSTM) for correctness checking."""
    H = params["w_hh"].shape[0]
    B = x_btI.shape[0]

    def step(carry, x_t):
        h, c = carry
        gates = x_t @ params["w_ih"] + h @ params["w_hh"] + params["bias"]
        i_g = jax.nn.sigmoid(gates[:, 0:H])
        f_g = jax.nn.sigmoid(gates[:, H:2 * H])
        g_g = jnp.tanh(gates[:, 2 * H:3 * H])
        o_g = jax.nn.sigmoid(gates[:, 3 * H:4 * H])
        c = f_g * c + i_g * g_g
        h = o_g * jnp.tanh(c)
        return (h, c), None

    h0 = jnp.zeros((B, H), jnp.float32)
    c0 = jnp.zeros((B, H), jnp.float32)
    (h_last, _), _ = jax.lax.scan(step, (h0, c0),
                                  jnp.transpose(x_btI, (1, 0, 2)))
    return (h_last @ params["w_fc"] + params["b_fc"])[:, 0]


if __name__ == "__main__":
    B, T, I, H = 2, 8, 4, 32
    key = jax.random.PRNGKey(0)
    kx, kp = jax.random.split(key)
    x = jax.random.normal(kx, (B, T, I), jnp.float32)
    params = init_params(kp, I, H)

    out = simple_rnn_forward(x, params)
    jax.block_until_ready(out)

    ref = reference_forward(x, params)
    assert out.shape == (B,), out.shape
    assert jnp.allclose(out, ref, rtol=1e-4, atol=1e-4), (out, ref)

    print("KERNEL_OK")
</pallas_src>

<mosaic_0001>
module attributes {stable_mosaic.version = 11 : i64} {
  func.func @lstm_kernel(%arg0: i32, %arg1: memref<2x8x4xf32, #tpu.memory_space<vmem>>, %arg2: memref<4x128xf32, #tpu.memory_space<vmem>>, %arg3: memref<32x128xf32, #tpu.memory_space<vmem>>, %arg4: memref<1x128xf32, #tpu.memory_space<vmem>>, %arg5: memref<2x32xf32, #tpu.memory_space<vmem>>) attributes {dimension_semantics = [#tpu.dimension_semantics<arbitrary>], iteration_bounds = array<i64: 1>, scalar_prefetch = 0 : i64, scratch_operands = 0 : i64, tpu.core_type = #tpu.core_type<tc>, window_params = [{pipeline_mode = #tpu.pipeline_mode<synchronous>, transform_indices = @transform_0, window_bounds = array<i64: 2, 8, 4>}, {pipeline_mode = #tpu.pipeline_mode<synchronous>, transform_indices = @transform_1, window_bounds = array<i64: 4, 128>}, {pipeline_mode = #tpu.pipeline_mode<synchronous>, transform_indices = @transform_2, window_bounds = array<i64: 32, 128>}, {pipeline_mode = #tpu.pipeline_mode<synchronous>, transform_indices = @transform_3, window_bounds = array<i64: 1, 128>}, {pipeline_mode = #tpu.pipeline_mode<synchronous>, transform_indices = @transform_4, window_bounds = array<i64: 2, 32>}]} {
    %c0 = arith.constant 0 : index
    %c0_0 = arith.constant 0 : index
    %c0_1 = arith.constant 0 : index
    %0 = vector.load %arg1[%c0, %c0_0, %c0_1] : memref<2x8x4xf32, #tpu.memory_space<vmem>>, vector<2x8x4xf32>
    %1 = vector.shape_cast %0 : vector<2x8x4xf32> to vector<16x4xf32>
    %c0_2 = arith.constant 0 : index
    %c0_3 = arith.constant 0 : index
    %2 = vector.load %arg2[%c0_2, %c0_3] : memref<4x128xf32, #tpu.memory_space<vmem>>, vector<4x128xf32>
    %cst = arith.constant dense<0.000000e+00> : vector<16x128xf32>
    %3 = tpu.matmul %1, %2, %cst {dimension_numbers = #tpu.dot_dimension_numbers<[1], [0], [0], [1], [0, 0, 1, 1], [], []>} : vector<16x4xf32>, vector<4x128xf32>, vector<16x128xf32> -> vector<16x128xf32>
    %4 = vector.shape_cast %3 : vector<16x128xf32> to vector<2x8x128xf32>
    %c0_4 = arith.constant 0 : index
    %c0_5 = arith.constant 0 : index
    %5 = vector.load %arg4[%c0_4, %c0_5] : memref<1x128xf32, #tpu.memory_space<vmem>>, vector<1x128xf32>
    %6 = vector.shape_cast %5 : vector<1x128xf32> to vector<1x1x128xf32>
    %7 = vector.broadcast %6 : vector<1x1x128xf32> to vector<2x8x128xf32>
    %8 = arith.addf %4, %7 : vector<2x8x128xf32>
    %c0_6 = arith.constant 0 : index
    %c0_7 = arith.constant 0 : index
    %9 = vector.load %arg3[%c0_6, %c0_7] : memref<32x128xf32, #tpu.memory_space<vmem>>, vector<32x128xf32>
    %cst_8 = arith.constant 0.000000e+00 : f32
    %10 = vector.broadcast %cst_8 : f32 to vector<2x32xf32>
    %cst_9 = arith.constant 0.000000e+00 : f32
    %11 = vector.broadcast %cst_9 : f32 to vector<2x32xf32>
    %12 = vector.extract_strided_slice %8 {offsets = [0, 0, 0], sizes = [2, 1, 128], strides = [1, 1, 1]} : vector<2x8x128xf32> to vector<2x1x128xf32>
    %13 = vector.shape_cast %12 : vector<2x1x128xf32> to vector<2x128xf32>
    %cst_10 = arith.constant dense<0.000000e+00> : vector<2x128xf32>
    %14 = tpu.matmul %10, %9, %cst_10 {dimension_numbers = #tpu.dot_dimension_numbers<[1], [0], [0], [1], [0, 0, 1, 1], [], []>} : vector<2x32xf32>, vector<32x128xf32>, vector<2x128xf32> -> vector<2x128xf32>
    %15 = arith.addf %13, %14 : vector<2x128xf32>
    %16 = vector.extract_strided_slice %15 {offsets = [0, 0], sizes = [2, 32], strides = [1, 1]} : vector<2x128xf32> to vector<2x32xf32>
    %17 = arith.negf %16 : vector<2x32xf32>
    %18 = math.exp %17 : vector<2x32xf32>
    %cst_11 = arith.constant 1.000000e+00 : f32
    %19 = vector.broadcast %cst_11 : f32 to vector<2x32xf32>
    %20 = arith.addf %19, %18 : vector<2x32xf32>
    %21 = arith.divf %19, %20 : vector<2x32xf32>
    %22 = vector.extract_strided_slice %15 {offsets = [0, 32], sizes = [2, 32], strides = [1, 1]} : vector<2x128xf32> to vector<2x32xf32>
    %23 = arith.negf %22 : vector<2x32xf32>
    %24 = math.exp %23 : vector<2x32xf32>
    %cst_12 = arith.constant 1.000000e+00 : f32
    %25 = vector.broadcast %cst_12 : f32 to vector<2x32xf32>
    %26 = arith.addf %25, %24 : vector<2x32xf32>
    %27 = arith.divf %25, %26 : vector<2x32xf32>
    %28 = vector.extract_strided_slice %15 {offsets = [0, 64], sizes = [2, 32], strides = [1, 1]} : vector<2x128xf32> to vector<2x32xf32>
    %29 = math.tanh %28 : vector<2x32xf32>
    %30 = vector.extract_strided_slice %15 {offsets = [0, 96], sizes = [2, 32], strides = [1, 1]} : vector<2x128xf32> to vector<2x32xf32>
    %31 = arith.negf %30 : vector<2x32xf32>
    %32 = math.exp %31 : vector<2x32xf32>
    %cst_13 = arith.constant 1.000000e+00 : f32
    %33 = vector.broadcast %cst_13 : f32 to vector<2x32xf32>
    %34 = arith.addf %33, %32 : vector<2x32xf32>
    %35 = arith.divf %33, %34 : vector<2x32xf32>
    %36 = arith.mulf %27, %11 : vector<2x32xf32>
    %37 = arith.mulf %21, %29 : vector<2x32xf32>
    %38 = arith.addf %36, %37 : vector<2x32xf32>
    %39 = math.tanh %38 : vector<2x32xf32>
    %40 = arith.mulf %35, %39 : vector<2x32xf32>
    %41 = vector.extract_strided_slice %8 {offsets = [0, 1, 0], sizes = [2, 1, 128], strides = [1, 1, 1]} : vector<2x8x128xf32> to vector<2x1x128xf32>
    %42 = vector.shape_cast %41 : vector<2x1x128xf32> to vector<2x128xf32>
    %cst_14 = arith.constant dense<0.000000e+00> : vector<2x128xf32>
    %43 = tpu.matmul %40, %9, %cst_14 {dimension_numbers = #tpu.dot_dimension_numbers<[1], [0], [0], [1], [0, 0, 1, 1], [], []>} : vector<2x32xf32>, vector<32x128xf32>, vector<2x128xf32> -> vector<2x128xf32>
    %44 = arith.addf %42, %43 : vector<2x128xf32>
    %45 = vector.extract_strided_slice %44 {offsets = [0, 0], sizes = [2, 32], strides = [1, 1]} : vector<2x128xf32> to vector<2x32xf32>
    %46 = arith.negf %45 : vector<2x32xf32>
    %47 = math.exp %46 : vector<2x32xf32>
    %cst_15 = arith.constant 1.000000e+00 : f32
    %48 = vector.broadcast %cst_15 : f32 to vector<2x32xf32>
    %49 = arith.addf %48, %47 : vector<2x32xf32>
    %50 = arith.divf %48, %49 : vector<2x32xf32>
    %51 = vector.extract_strided_slice %44 {offsets = [0, 32], sizes = [2, 32], strides = [1, 1]} : vector<2x128xf32> to vector<2x32xf32>
    %52 = arith.negf %51 : vector<2x32xf32>
    %53 = math.exp %52 : vector<2x32xf32>
    %cst_16 = arith.constant 1.000000e+00 : f32
    %54 = vector.broadcast %cst_16 : f32 to vector<2x32xf32>
    %55 = arith.addf %54, %53 : vector<2x32xf32>
    %56 = arith.divf %54, %55 : vector<2x32xf32>
    %57 = vector.extract_strided_slice %44 {offsets = [0, 64], sizes = [2, 32], strides = [1, 1]} : vector<2x128xf32> to vector<2x32xf32>
    %58 = math.tanh %57 : vector<2x32xf32>
    %59 = vector.extract_strided_slice %44 {offsets = [0, 96], sizes = [2, 32], strides = [1, 1]} : vector<2x128xf32> to vector<2x32xf32>
    %60 = arith.negf %59 : vector<2x32xf32>
    %61 = math.exp %60 : vector<2x32xf32>
    %cst_17 = arith.constant 1.000000e+00 : f32
    %62 = vector.broadcast %cst_17 : f32 to vector<2x32xf32>
    %63 = arith.addf %62, %61 : vector<2x32xf32>
    %64 = arith.divf %62, %63 : vector<2x32xf32>
    %65 = arith.mulf %56, %38 : vector<2x32xf32>
    %66 = arith.mulf %50, %58 : vector<2x32xf32>
    %67 = arith.addf %65, %66 : vector<2x32xf32>
    %68 = math.tanh %67 : vector<2x32xf32>
    %69 = arith.mulf %64, %68 : vector<2x32xf32>
    %70 = vector.extract_strided_slice %8 {offsets = [0, 2, 0], sizes = [2, 1, 128], strides = [1, 1, 1]} : vector<2x8x128xf32> to vector<2x1x128xf32>
    %71 = vector.shape_cast %70 : vector<2x1x128xf32> to vector<2x128xf32>
    %cst_18 = arith.constant dense<0.000000e+00> : vector<2x128xf32>
    %72 = tpu.matmul %69, %9, %cst_18 {dimension_numbers = #tpu.dot_dimension_numbers<[1], [0], [0], [1], [0, 0, 1, 1], [], []>} : vector<2x32xf32>, vector<32x128xf32>, vector<2x128xf32> -> vector<2x128xf32>
    %73 = arith.addf %71, %72 : vector<2x128xf32>
    %74 = vector.extract_strided_slice %73 {offsets = [0, 0], sizes = [2, 32], strides = [1, 1]} : vector<2x128xf32> to vector<2x32xf32>
    %75 = arith.negf %74 : vector<2x32xf32>
    %76 = math.exp %75 : vector<2x32xf32>
    %cst_19 = arith.constant 1.000000e+00 : f32
    %77 = vector.broadcast %cst_19 : f32 to vector<2x32xf32>
    %78 = arith.addf %77, %76 : vector<2x32xf32>
    %79 = arith.divf %77, %78 : vector<2x32xf32>
    %80 = vector.extract_strided_slice %73 {offsets = [0, 32], sizes = [2, 32], strides = [1, 1]} : vector<2x128xf32> to vector<2x32xf32>
    %81 = arith.negf %80 : vector<2x32xf32>
    %82 = math.exp %81 : vector<2x32xf32>
    %cst_20 = arith.constant 1.000000e+00 : f32
    %83 = vector.broadcast %cst_20 : f32 to vector<2x32xf32>
    %84 = arith.addf %83, %82 : vector<2x32xf32>
    %85 = arith.divf %83, %84 : vector<2x32xf32>
    %86 = vector.extract_strided_slice %73 {offsets = [0, 64], sizes = [2, 32], strides = [1, 1]} : vector<2x128xf32> to vector<2x32xf32>
    %87 = math.tanh %86 : vector<2x32xf32>
    %88 = vector.extract_strided_slice %73 {offsets = [0, 96], sizes = [2, 32], strides = [1, 1]} : vector<2x128xf32> to vector<2x32xf32>
    %89 = arith.negf %88 : vector<2x32xf32>
    %90 = math.exp %89 : vector<2x32xf32>
    %cst_21 = arith.constant 1.000000e+00 : f32
    %91 = vector.broadcast %cst_21 : f32 to vector<2x32xf32>
    %92 = arith.addf %91, %90 : vector<2x32xf32>
    %93 = arith.divf %91, %92 : vector<2x32xf32>
    %94 = arith.mulf %85, %67 : vector<2x32xf32>
    %95 = arith.mulf %79, %87 : vector<2x32xf32>
    %96 = arith.addf %94, %95 : vector<2x32xf32>
    %97 = math.tanh %96 : vector<2x32xf32>
    %98 = arith.mulf %93, %97 : vector<2x32xf32>
    %99 = vector.extract_strided_slice %8 {offsets = [0, 3, 0], sizes = [2, 1, 128], strides = [1, 1, 1]} : vector<2x8x128xf32> to vector<2x1x128xf32>
    %100 = vector.shape_cast %99 : vector<2x1x128xf32> to vector<2x128xf32>
    %cst_22 = arith.constant dense<0.000000e+00> : vector<2x128xf32>
    %101 = tpu.matmul %98, %9, %cst_22 {dimension_numbers = #tpu.dot_dimension_numbers<[1], [0], [0], [1], [0, 0, 1, 1], [], []>} : vector<2x32xf32>, vector<32x128xf32>, vector<2x128xf32> -> vector<2x128xf32>
    %102 = arith.addf %100, %101 : vector<2x128xf32>
    %103 = vector.extract_strided_slice %102 {offsets = [0, 0], sizes = [2, 32], strides = [1, 1]} : vector<2x128xf32> to vector<2x32xf32>
    %104 = arith.negf %103 : vector<2x32xf32>
    %105 = math.exp %104 : vector<2x32xf32>
    %cst_23 = arith.constant 1.000000e+00 : f32
    %106 = vector.broadcast %cst_23 : f32 to vector<2x32xf32>
    %107 = arith.addf %106, %105 : vector<2x32xf32>
    %108 = arith.divf %106, %107 : vector<2x32xf32>
    %109 = vector.extract_strided_slice %102 {offsets = [0, 32], sizes = [2, 32], strides = [1, 1]} : vector<2x128xf32> to vector<2x32xf32>
    %110 = arith.negf %109 : vector<2x32xf32>
    %111 = math.exp %110 : vector<2x32xf32>
    %cst_24 = arith.constant 1.000000e+00 : f32
    %112 = vector.broadcast %cst_24 : f32 to vector<2x32xf32>
    %113 = arith.addf %112, %111 : vector<2x32xf32>
    %114 = arith.divf %112, %113 : vector<2x32xf32>
    %115 = vector.extract_strided_slice %102 {offsets = [0, 64], sizes = [2, 32], strides = [1, 1]} : vector<2x128xf32> to vector<2x32xf32>
    %116 = math.tanh %115 : vector<2x32xf32>
    %117 = vector.extract_strided_slice %102 {offsets = [0, 96], sizes = [2, 32], strides = [1, 1]} : vector<2x128xf32> to vector<2x32xf32>
    %118 = arith.negf %117 : vector<2x32xf32>
    %119 = math.exp %118 : vector<2x32xf32>
    %cst_25 = arith.constant 1.000000e+00 : f32
    %120 = vector.broadcast %cst_25 : f32 to vector<2x32xf32>
    %121 = arith.addf %120, %119 : vector<2x32xf32>
    %122 = arith.divf %120, %121 : vector<2x32xf32>
    %123 = arith.mulf %114, %96 : vector<2x32xf32>
    %124 = arith.mulf %108, %116 : vector<2x32xf32>
    %125 = arith.addf %123, %124 : vector<2x32xf32>
    %126 = math.tanh %125 : vector<2x32xf32>
    %127 = arith.mulf %122, %126 : vector<2x32xf32>
    %128 = vector.extract_strided_slice %8 {offsets = [0, 4, 0], sizes = [2, 1, 128], strides = [1, 1, 1]} : vector<2x8x128xf32> to vector<2x1x128xf32>
    %129 = vector.shape_cast %128 : vector<2x1x128xf32> to vector<2x128xf32>
    %cst_26 = arith.constant dense<0.000000e+00> : vector<2x128xf32>
    %130 = tpu.matmul %127, %9, %cst_26 {dimension_numbers = #tpu.dot_dimension_numbers<[1], [0], [0], [1], [0, 0, 1, 1], [], []>} : vector<2x32xf32>, vector<32x128xf32>, vector<2x128xf32> -> vector<2x128xf32>
    %131 = arith.addf %129, %130 : vector<2x128xf32>
    %132 = vector.extract_strided_slice %131 {offsets = [0, 0], sizes = [2, 32], strides = [1, 1]} : vector<2x128xf32> to vector<2x32xf32>
    %133 = arith.negf %132 : vector<2x32xf32>
    %134 = math.exp %133 : vector<2x32xf32>
    %cst_27 = arith.constant 1.000000e+00 : f32
    %135 = vector.broadcast %cst_27 : f32 to vector<2x32xf32>
    %136 = arith.addf %135, %134 : vector<2x32xf32>
    %137 = arith.divf %135, %136 : vector<2x32xf32>
    %138 = vector.extract_strided_slice %131 {offsets = [0, 32], sizes = [2, 32], strides = [1, 1]} : vector<2x128xf32> to vector<2x32xf32>
    %139 = arith.negf %138 : vector<2x32xf32>
    %140 = math.exp %139 : vector<2x32xf32>
    %cst_28 = arith.constant 1.000000e+00 : f32
    %141 = vector.broadcast %cst_28 : f32 to vector<2x32xf32>
    %142 = arith.addf %141, %140 : vector<2x32xf32>
    %143 = arith.divf %141, %142 : vector<2x32xf32>
    %144 = vector.extract_strided_slice %131 {offsets = [0, 64], sizes = [2, 32], strides = [1, 1]} : vector<2x128xf32> to vector<2x32xf32>
    %145 = math.tanh %144 : vector<2x32xf32>
    %146 = vector.extract_strided_slice %131 {offsets = [0, 96], sizes = [2, 32], strides = [1, 1]} : vector<2x128xf32> to vector<2x32xf32>
    %147 = arith.negf %146 : vector<2x32xf32>
    %148 = math.exp %147 : vector<2x32xf32>
    %cst_29 = arith.constant 1.000000e+00 : f32
    %149 = vector.broadcast %cst_29 : f32 to vector<2x32xf32>
    %150 = arith.addf %149, %148 : vector<2x32xf32>
    %151 = arith.divf %149, %150 : vector<2x32xf32>
    %152 = arith.mulf %143, %125 : vector<2x32xf32>
    %153 = arith.mulf %137, %145 : vector<2x32xf32>
    %154 = arith.addf %152, %153 : vector<2x32xf32>
    %155 = math.tanh %154 : vector<2x32xf32>
    %156 = arith.mulf %151, %155 : vector<2x32xf32>
    %157 = vector.extract_strided_slice %8 {offsets = [0, 5, 0], sizes = [2, 1, 128], strides = [1, 1, 1]} : vector<2x8x128xf32> to vector<2x1x128xf32>
    %158 = vector.shape_cast %157 : vector<2x1x128xf32> to vector<2x128xf32>
    %cst_30 = arith.constant dense<0.000000e+00> : vector<2x128xf32>
    %159 = tpu.matmul %156, %9, %cst_30 {dimension_numbers = #tpu.dot_dimension_numbers<[1], [0], [0], [1], [0, 0, 1, 1], [], []>} : vector<2x32xf32>, vector<32x128xf32>, vector<2x128xf32> -> vector<2x128xf32>
    %160 = arith.addf %158, %159 : vector<2x128xf32>
    %161 = vector.extract_strided_slice %160 {offsets = [0, 0], sizes = [2, 32], strides = [1, 1]} : vector<2x128xf32> to vector<2x32xf32>
    %162 = arith.negf %161 : vector<2x32xf32>
    %163 = math.exp %162 : vector<2x32xf32>
    %cst_31 = arith.constant 1.000000e+00 : f32
    %164 = vector.broadcast %cst_31 : f32 to vector<2x32xf32>
    %165 = arith.addf %164, %163 : vector<2x32xf32>
    %166 = arith.divf %164, %165 : vector<2x32xf32>
    %167 = vector.extract_strided_slice %160 {offsets = [0, 32], sizes = [2, 32], strides = [1, 1]} : vector<2x128xf32> to vector<2x32xf32>
    %168 = arith.negf %167 : vector<2x32xf32>
    %169 = math.exp %168 : vector<2x32xf32>
    %cst_32 = arith.constant 1.000000e+00 : f32
    %170 = vector.broadcast %cst_32 : f32 to vector<2x32xf32>
    %171 = arith.addf %170, %169 : vector<2x32xf32>
    %172 = arith.divf %170, %171 : vector<2x32xf32>
    %173 = vector.extract_strided_slice %160 {offsets = [0, 64], sizes = [2, 32], strides = [1, 1]} : vector<2x128xf32> to vector<2x32xf32>
    %174 = math.tanh %173 : vector<2x32xf32>
    %175 = vector.extract_strided_slice %160 {offsets = [0, 96], sizes = [2, 32], strides = [1, 1]} : vector<2x128xf32> to vector<2x32xf32>
    %176 = arith.negf %175 : vector<2x32xf32>
    %177 = math.exp %176 : vector<2x32xf32>
    %cst_33 = arith.constant 1.000000e+00 : f32
    %178 = vector.broadcast %cst_33 : f32 to vector<2x32xf32>
    %179 = arith.addf %178, %177 : vector<2x32xf32>
    %180 = arith.divf %178, %179 : vector<2x32xf32>
    %181 = arith.mulf %172, %154 : vector<2x32xf32>
    %182 = arith.mulf %166, %174 : vector<2x32xf32>
    %183 = arith.addf %181, %182 : vector<2x32xf32>
    %184 = math.tanh %183 : vector<2x32xf32>
    %185 = arith.mulf %180, %184 : vector<2x32xf32>
    %186 = vector.extract_strided_slice %8 {offsets = [0, 6, 0], sizes = [2, 1, 128], strides = [1, 1, 1]} : vector<2x8x128xf32> to vector<2x1x128xf32>
    %187 = vector.shape_cast %186 : vector<2x1x128xf32> to vector<2x128xf32>
    %cst_34 = arith.constant dense<0.000000e+00> : vector<2x128xf32>
    %188 = tpu.matmul %185, %9, %cst_34 {dimension_numbers = #tpu.dot_dimension_numbers<[1], [0], [0], [1], [0, 0, 1, 1], [], []>} : vector<2x32xf32>, vector<32x128xf32>, vector<2x128xf32> -> vector<2x128xf32>
    %189 = arith.addf %187, %188 : vector<2x128xf32>
    %190 = vector.extract_strided_slice %189 {offsets = [0, 0], sizes = [2, 32], strides = [1, 1]} : vector<2x128xf32> to vector<2x32xf32>
    %191 = arith.negf %190 : vector<2x32xf32>
    %192 = math.exp %191 : vector<2x32xf32>
    %cst_35 = arith.constant 1.000000e+00 : f32
    %193 = vector.broadcast %cst_35 : f32 to vector<2x32xf32>
    %194 = arith.addf %193, %192 : vector<2x32xf32>
    %195 = arith.divf %193, %194 : vector<2x32xf32>
    %196 = vector.extract_strided_slice %189 {offsets = [0, 32], sizes = [2, 32], strides = [1, 1]} : vector<2x128xf32> to vector<2x32xf32>
    %197 = arith.negf %196 : vector<2x32xf32>
    %198 = math.exp %197 : vector<2x32xf32>
    %cst_36 = arith.constant 1.000000e+00 : f32
    %199 = vector.broadcast %cst_36 : f32 to vector<2x32xf32>
    %200 = arith.addf %199, %198 : vector<2x32xf32>
    %201 = arith.divf %199, %200 : vector<2x32xf32>
    %202 = vector.extract_strided_slice %189 {offsets = [0, 64], sizes = [2, 32], strides = [1, 1]} : vector<2x128xf32> to vector<2x32xf32>
    %203 = math.tanh %202 : vector<2x32xf32>
    %204 = vector.extract_strided_slice %189 {offsets = [0, 96], sizes = [2, 32], strides = [1, 1]} : vector<2x128xf32> to vector<2x32xf32>
    %205 = arith.negf %204 : vector<2x32xf32>
    %206 = math.exp %205 : vector<2x32xf32>
    %cst_37 = arith.constant 1.000000e+00 : f32
    %207 = vector.broadcast %cst_37 : f32 to vector<2x32xf32>
    %208 = arith.addf %207, %206 : vector<2x32xf32>
    %209 = arith.divf %207, %208 : vector<2x32xf32>
    %210 = arith.mulf %201, %183 : vector<2x32xf32>
    %211 = arith.mulf %195, %203 : vector<2x32xf32>
    %212 = arith.addf %210, %211 : vector<2x32xf32>
    %213 = math.tanh %212 : vector<2x32xf32>
    %214 = arith.mulf %209, %213 : vector<2x32xf32>
    %215 = vector.extract_strided_slice %8 {offsets = [0, 7, 0], sizes = [2, 1, 128], strides = [1, 1, 1]} : vector<2x8x128xf32> to vector<2x1x128xf32>
    %216 = vector.shape_cast %215 : vector<2x1x128xf32> to vector<2x128xf32>
    %cst_38 = arith.constant dense<0.000000e+00> : vector<2x128xf32>
    %217 = tpu.matmul %214, %9, %cst_38 {dimension_numbers = #tpu.dot_dimension_numbers<[1], [0], [0], [1], [0, 0, 1, 1], [], []>} : vector<2x32xf32>, vector<32x128xf32>, vector<2x128xf32> -> vector<2x128xf32>
    %218 = arith.addf %216, %217 : vector<2x128xf32>
    %219 = vector.extract_strided_slice %218 {offsets = [0, 0], sizes = [2, 32], strides = [1, 1]} : vector<2x128xf32> to vector<2x32xf32>
    %220 = arith.negf %219 : vector<2x32xf32>
    %221 = math.exp %220 : vector<2x32xf32>
    %cst_39 = arith.constant 1.000000e+00 : f32
    %222 = vector.broadcast %cst_39 : f32 to vector<2x32xf32>
    %223 = arith.addf %222, %221 : vector<2x32xf32>
    %224 = arith.divf %222, %223 : vector<2x32xf32>
    %225 = vector.extract_strided_slice %218 {offsets = [0, 32], sizes = [2, 32], strides = [1, 1]} : vector<2x128xf32> to vector<2x32xf32>
    %226 = arith.negf %225 : vector<2x32xf32>
    %227 = math.exp %226 : vector<2x32xf32>
    %cst_40 = arith.constant 1.000000e+00 : f32
    %228 = vector.broadcast %cst_40 : f32 to vector<2x32xf32>
    %229 = arith.addf %228, %227 : vector<2x32xf32>
    %230 = arith.divf %228, %229 : vector<2x32xf32>
    %231 = vector.extract_strided_slice %218 {offsets = [0, 64], sizes = [2, 32], strides = [1, 1]} : vector<2x128xf32> to vector<2x32xf32>
    %232 = math.tanh %231 : vector<2x32xf32>
    %233 = vector.extract_strided_slice %218 {offsets = [0, 96], sizes = [2, 32], strides = [1, 1]} : vector<2x128xf32> to vector<2x32xf32>
    %234 = arith.negf %233 : vector<2x32xf32>
    %235 = math.exp %234 : vector<2x32xf32>
    %cst_41 = arith.constant 1.000000e+00 : f32
    %236 = vector.broadcast %cst_41 : f32 to vector<2x32xf32>
    %237 = arith.addf %236, %235 : vector<2x32xf32>
    %238 = arith.divf %236, %237 : vector<2x32xf32>
    %239 = arith.mulf %230, %212 : vector<2x32xf32>
    %240 = arith.mulf %224, %232 : vector<2x32xf32>
    %241 = arith.addf %239, %240 : vector<2x32xf32>
    %242 = math.tanh %241 : vector<2x32xf32>
    %243 = arith.mulf %238, %242 : vector<2x32xf32>
    %c0_42 = arith.constant 0 : index
    %c0_43 = arith.constant 0 : index
    %244 = vector.load %arg5[%c0_42, %c0_43] : memref<2x32xf32, #tpu.memory_space<vmem>>, vector<2x32xf32>
    tpu.vector_store %arg5[%c0_42, %c0_43], %243 {strides = array<i32>} : memref<2x32xf32, #tpu.memory_space<vmem>>, vector<2x32xf32>,
    return
  }
  func.func @transform_0(%arg0: i32) -> (i32, i32, i32) {
    %c0_i32 = arith.constant 0 : i32
    %c0_i32_0 = arith.constant 0 : i32
    %c0_i32_1 = arith.constant 0 : i32
    %c0_i32_2 = arith.constant 0 : i32
    return %c0_i32, %c0_i32_0, %c0_i32_1 : i32, i32, i32
  }
  func.func @transform_1(%arg0: i32) -> (i32, i32) {
    %c0_i32 = arith.constant 0 : i32
    %c0_i32_0 = arith.constant 0 : i32
    %c0_i32_1 = arith.constant 0 : i32
    return %c0_i32, %c0_i32_0 : i32, i32
  }
  func.func @transform_2(%arg0: i32) -> (i32, i32) {
    %c0_i32 = arith.constant 0 : i32
    %c0_i32_0 = arith.constant 0 : i32
    %c0_i32_1 = arith.constant 0 : i32
    return %c0_i32, %c0_i32_0 : i32, i32
  }
  func.func @transform_3(%arg0: i32) -> (i32, i32) {
    %c0_i32 = arith.constant 0 : i32
    %c0_i32_0 = arith.constant 0 : i32
    %c0_i32_1 = arith.constant 0 : i32
    return %c0_i32, %c0_i32_0 : i32, i32
  }
  func.func @transform_4(%arg0: i32) -> (i32, i32) {
    %c0_i32 = arith.constant 0 : i32
    %c0_i32_0 = arith.constant 0 : i32
    %c0_i32_1 = arith.constant 0 : i32
    return %c0_i32, %c0_i32_0 : i32, i32
  }
}

</mosaic_0001>

<llo_original>
// kernel: tpu_custom_call.1
$region0: #{tpu_custom_call.1}
  #allocation0 [shape = 'u32[]', space=smem, size = 0x4, offset = 0x4, fixed_abs, tag = 'smem constant byte address 0x4 - core index']
  #allocation1 [shape = 'u32[144,128]{1,0:T(1,128)}', space=vmem, size = 0x12000, scoped, tag = 'internal scratch']
  %s0 = inlined_call_operand.vmem [shape: f32[2,8,4], index: 0, kind: input, shape index: {}]
  %s1 = inlined_call_operand.vmem [shape: f32[4,128], index: 1, kind: input, shape index: {}]
  %s2 = inlined_call_operand.hbm [shape: f32[32,128], index: 2, kind: input, shape index: {}]
  %s3 = inlined_call_operand.vmem [shape: f32[1,128], index: 3, kind: input, shape index: {}]
  %s4 = inlined_call_operand.hbm [shape: f32[2,32], index: 4, kind: output, shape index: {}]
  %s5 = sld [smem:[#allocation0]]
  $region30: #{tpu_custom_call.1} parent=0
    _
  %s7 = ssub.s32 1, %s5
  %s8 = scalar_select 0, %s7, %s5
  $region1: #{tpu_custom_call.1} parent=0
    #allocation2 [shape = 'u8[16384]{0}', space=vmem, size = 0x4000, scoped, tag = 'input window, operand 2, single buffered']
    #allocation3 [shape = 's32[1]{0}', space=sflag, size = 0x4, scoped, tag = 'scoped memory for tpu_custom_call.1']
    #allocation4 [shape = 's32[1]{0}', space=sflag, size = 0x4, scoped, tag = 'scoped memory for tpu_custom_call.1']
    #allocation5 [shape = 'u8[1024]{0}', space=vmem, size = 0x400, scoped, tag = 'output window, operand 0, single buffered']
    %9 = vsyncpa [#allocation3], 0
    %10 = vsyncpa [#allocation4], 0
    // Predicated region
    $region2: #{tpu_custom_call.1} parent=1 // pred_check
      _
    $region3: #{tpu_custom_call.1} parent=1 // pred_check_branch
      %12 = sbr.rel (0) target = $region5
    $region4: #{tpu_custom_call.1} parent=1 // pred_region
      _
    $region5: #{tpu_custom_call.1} parent=1 // pred_fallthru
      _
    // Predicated region
    $region6: #{tpu_custom_call.1} parent=1 // pred_check
      _
    $region7: #{tpu_custom_call.1} parent=1 // pred_check_branch
      %14 = sbr.rel (0) target = $region9
    $region8: #{tpu_custom_call.1} parent=1 // pred_region
      _
    $region9: #{tpu_custom_call.1} parent=1 // pred_fallthru
      _
    // Predicated region
    $region10: #{tpu_custom_call.1} parent=1 // pred_check
      _
    $region11: #{tpu_custom_call.1} parent=1 // pred_check_branch
      %16 = sbr.rel (0) target = $region13
    $region12: #{tpu_custom_call.1} parent=1 // pred_region
      %s18 = ssub.s32 512, 512
      %19 = vsyncadd [#allocation3], %s18
      %s20 = sshll.u32 [#allocation2], 4
      %s21 = int_to_ptr.vmem [resolvable:$true] %s20
      %26 = dma.hbm_to_vmem [thread:$0]  %s2, 512, %s21, [#allocation3], 128, 128, 8
    $region13: #{tpu_custom_call.1} parent=1 // pred_fallthru
      _
    // Predicated region
    $region14: #{tpu_custom_call.1} parent=1 // pred_check
      _
    $region15: #{tpu_custom_call.1} parent=1 // pred_check_branch
      %28 = sbr.rel (0) target = $region17
    $region16: #{tpu_custom_call.1} parent=1 // pred_region
      _
    $region17: #{tpu_custom_call.1} parent=1 // pred_fallthru
      _
    // Predicated region
    $region18: #{tpu_custom_call.1} parent=1 // pred_check
      _
    $region19: #{tpu_custom_call.1} parent=1 // pred_check_branch
      %30 = sbr.rel (0) target = $region21
    $region20: #{tpu_custom_call.1} parent=1 // pred_region
      %31 = dma.done [#allocation3], 512
    $region21: #{tpu_custom_call.1} parent=1 // pred_fallthru
      _
    %v32 = vld [vmem:[%s0] sm:$0xff]
    %v33 = vld [vmem:[%s0 + $0x8] sm:$0xff]
    %v34 = vld [vmem:[%s1] sm:$0xf]
    %vm35 = vcmask 31744
    %v37 = vsel %vm35, %v32, 0
    %v40 = vsel %vm35, %v33, 0
    %vm42 = vcmask 1043456
    %v44 = vsel %vm42, %v34, 0
    %46 = vmatprep.subr.mxu0 0.0
    %47 = vmatpush1.msra.mxu0 %v44
    %48 = vmatprep.subr.mxu0 0.0
    %49 = vmatpush1.msra.mxu0 0.0
    %50 = vmatprep.subr.mxu0 0.0
    %51 = vmatpush1.msra.mxu0 0.0
    %52 = vmatprep.subr.mxu0 0.0
    %53 = vmatpush1.msra.mxu0 0.0
    %54 = vmatprep.subr.mxu0 0.0
    %55 = vmatpush1.msra.mxu0 0.0
    %56 = vmatprep.subr.mxu0 0.0
    %57 = vmatpush1.msra.mxu0 0.0
    %58 = vmatprep.subr.mxu0 0.0
    %59 = vmatpush1.msra.mxu0 0.0
    %60 = vmatprep.subr.mxu0 0.0
    %61 = vmatpush1.msra.mxu0 0.0
    %62 = vmatprep.subr.mxu0 0.0
    %63 = vmatpush1.msra.mxu0 0.0
    %64 = vmatprep.subr.mxu0 0.0
    %65 = vmatpush1.msra.mxu0 0.0
    %66 = vmatprep.subr.mxu0 0.0
    %67 = vmatpush1.msra.mxu0 0.0
    %68 = vmatprep.subr.mxu0 0.0
    %69 = vmatpush1.msra.mxu0 0.0
    %70 = vmatprep.subr.mxu0 0.0
    %71 = vmatpush1.msra.mxu0 0.0
    %72 = vmatprep.subr.mxu0 0.0
    %73 = vmatpush1.msra.mxu0 0.0
    %74 = vmatprep.subr.mxu0 0.0
    %75 = vmatpush1.msra.mxu0 0.0
    %76 = vmatprep.subr.mxu0 0.0
    %77 = vmatpush1.msra.mxu0 0.0
    %78 = vmatprep.subr.mxu0 0.0
    %79 = vmatpush1.msra.mxu0 0.0
    %80 = vmatprep.subr.mxu0 0.0
    %81 = vmatpush1.msra.mxu0 0.0
    %82 = vmatprep.subr.mxu0 0.0
    %83 = vmatpush1.msra.mxu0 0.0
    %84 = vmatprep.subr.mxu0 0.0
    %85 = vmatpush1.msra.mxu0 0.0
    %86 = vmatprep.subr.mxu0 0.0
    %87 = vmatpush1.msra.mxu0 0.0
    %88 = vmatprep.subr.mxu0 0.0
    %89 = vmatpush1.msra.mxu0 0.0
    %90 = vmatprep.subr.mxu0 0.0
    %91 = vmatpush1.msra.mxu0 0.0
    %92 = vmatprep.subr.mxu0 0.0
    %93 = vmatpush1.msra.mxu0 0.0
    %94 = vmatprep.subr.mxu0 0.0
    %95 = vmatpush1.msra.mxu0 0.0
    %96 = vmatprep.subr.mxu0 0.0
    %97 = vmatpush1.msra.mxu0 0.0
    %98 = vmatprep.subr.mxu0 0.0
    %99 = vmatpush1.msra.mxu0 0.0
    %100 = vmatprep.subr.mxu0 0.0
    %101 = vmatpush1.msra.mxu0 0.0
    %102 = vmatprep.subr.mxu0 0.0
    %103 = vmatpush1.msra.mxu0 0.0
    %104 = vmatprep.subr.mxu0 0.0
    %105 = vmatpush1.msra.mxu0 0.0
    %106 = vmatprep.subr.mxu0 0.0
    %107 = vmatpush1.msra.mxu0 0.0
    %108 = vmatprep.subr.mxu0 0.0
    %109 = vmatpush1.msra.mxu0 0.0
    %110 = vmatprep.mubr.f32.mxu0 0.0
    %111 = vmatmul.mubr.f32.gmra.mrb[0].mxu0 %v37
    %v112 = vpop.f32.mrb[0].mxu0
    %v113 = vadd.f32 0.0, %v112
    %v114 = vpop.f32.mrb[0].mxu0
    %115 = vmatprep.mubr.f32.mxu0 0.0
    %116 = vmatmul.mubr.f32.gmra.mrb[0].mxu0 %v40
    %v117 = vpop.f32.mrb[0].mxu0
    %v118 = vadd.f32 0.0, %v117
    %v119 = vpop.f32.mrb[0].mxu0
    %120 = vdwg.mxu0
    %v121 = vld [vmem:[%s3] sm:$0x1]
    %v123 = vlaneseq
    %v124 = vshrl.u32 %v123, 7
    %v125 = vsub.s32 0, %v124
    %v126 = vrot.slane %v121, %v125
    %v128 = vadd.f32 %v113, %v126
    %v129 = vadd.f32 %v118, %v126
    %v130 = vld [vmem:[#allocation2] sm:$0xff]
    %v131 = vld [vmem:[#allocation2 + $0x8] sm:$0xff]
    %v132 = vld [vmem:[#allocation2 + $0x10] sm:$0xff]
    %v133 = vld [vmem:[#allocation2 + $0x18] sm:$0xff]
    %vm134 = vcmask 261120
    %v136 = vsel %vm134, 0.0, 0
    %138 = vmatprep.subr.mxu0 0.0
    %139 = vmatpush1.msra.mxu0 %v130
    %140 = vmatprep.subr.mxu0 0.0
    %141 = vmatpush1.msra.mxu0 %v131
    %142 = vmatprep.subr.mxu0 0.0
    %143 = vmatpush1.msra.mxu0 %v132
    %144 = vmatprep.subr.mxu0 0.0
    %145 = vmatpush1.msra.mxu0 %v133
    %146 = vmatprep.subr.mxu0 0.0
    %147 = vmatpush1.msra.mxu0 0.0
    %148 = vmatprep.subr.mxu0 0.0
    %149 = vmatpush1.msra.mxu0 0.0
    %150 = vmatprep.subr.mxu0 0.0
    %151 = vmatpush1.msra.mxu0 0.0
    %152 = vmatprep.subr.mxu0 0.0
    %153 = vmatpush1.msra.mxu0 0.0
    %154 = vmatprep.subr.mxu0 0.0
    %155 = vmatpush1.msra.mxu0 0.0
    %156 = vmatprep.subr.mxu0 0.0
    %157 = vmatpush1.msra.mxu0 0.0
    %158 = vmatprep.subr.mxu0 0.0
    %159 = vmatpush1.msra.mxu0 0.0
    %160 = vmatprep.subr.mxu0 0.0
    %161 = vmatpush1.msra.mxu0 0.0
    %162 = vmatprep.subr.mxu0 0.0
    %163 = vmatpush1.msra.mxu0 0.0
    %164 = vmatprep.subr.mxu0 0.0
    %165 = vmatpush1.msra.mxu0 0.0
    %166 = vmatprep.subr.mxu0 0.0
    %167 = vmatpush1.msra.mxu0 0.0
    %168 = vmatprep.subr.mxu0 0.0
    %169 = vmatpush1.msra.mxu0 0.0
    %170 = vmatprep.subr.mxu0 0.0
    %171 = vmatpush1.msra.mxu0 0.0
    %172 = vmatprep.subr.mxu0 0.0
    %173 = vmatpush1.msra.mxu0 0.0
    %174 = vmatprep.subr.mxu0 0.0
    %175 = vmatpush1.msra.mxu0 0.0
    %176 = vmatprep.subr.mxu0 0.0
    %177 = vmatpush1.msra.mxu0 0.0
    %178 = vmatprep.subr.mxu0 0.0
    %179 = vmatpush1.msra.mxu0 0.0
    %180 = vmatprep.subr.mxu0 0.0
    %181 = vmatpush1.msra.mxu0 0.0
    %182 = vmatprep.subr.mxu0 0.0
    %183 = vmatpush1.msra.mxu0 0.0
    %184 = vmatprep.subr.mxu0 0.0
    %185 = vmatpush1.msra.mxu0 0.0
    %186 = vmatprep.subr.mxu0 0.0
    %187 = vmatpush1.msra.mxu0 0.0
    %188 = vmatprep.subr.mxu0 0.0
    %189 = vmatpush1.msra.mxu0 0.0
    %190 = vmatprep.subr.mxu0 0.0
    %191 = vmatpush1.msra.mxu0 0.0
    %192 = vmatprep.subr.mxu0 0.0
    %193 = vmatpush1.msra.mxu0 0.0
    %194 = vmatprep.subr.mxu0 0.0
    %195 = vmatpush1.msra.mxu0 0.0
    %196 = vmatprep.subr.mxu0 0.0
    %197 = vmatpush1.msra.mxu0 0.0
    %198 = vmatprep.subr.mxu0 0.0
    %199 = vmatpush1.msra.mxu0 0.0
    %200 = vmatprep.subr.mxu0 0.0
    %201 = vmatpush1.msra.mxu0 0.0
    %202 = vmatprep.mubr.f32.mxu0 0.0
    %203 = vmatmul.mubr.f32.gmra.mrb[0].mxu0 %v136
    %v204 = vpop.f32.mrb[0].mxu0
    %v205 = vadd.f32 0.0, %v204
    %v206 = vpop.f32.mrb[0].mxu0
    %207 = vdwg.mxu0
    %v209 = vrot.slane %v205, 1
    %v212 = vadd.f32 %v128, %v205
    %v213 = vadd.f32 %v129, %v209
    %v214 = vxor.u32 %v212, 2147483648
    %v215 = vxor.u32 %v213, 2147483648
    %v216 = vmul.f32 %v214, 1.442695
    %v217 = vpow.pop %v216
    %v218 = vmul.f32 %v215, 1.442695
    %v219 = vpow.pop %v218
    %v220 = vadd.f32 %v217, 1.0
    %v221 = vadd.f32 %v219, 1.0
    %v222 = vrcp.pop %v220
    %v223 = vmul.f32 1.0, %v222
    %v224 = vrcp.pop %v221
    %v225 = vmul.f32 1.0, %v224
    %v226 = vtanh.pop %v212
    %v227 = vtanh.pop %v213
    %v228 = vmul.f32 %v223, 0.0
    %v229 = vmul.f32 %v225, 0.0
    %232 = vrot.lane.b32.xlu0 %v226, 64
    %v233 = vpop.permute.xlu0 %232
    %234 = vrot.lane.b32.xlu0 %v227, 64
    %v235 = vpop.permute.xlu0 %234
    %v238 = vmul.f32 %v223, %v233
    %v239 = vmul.f32 %v225, %v235
    %242 = vrot.lane.b32.xlu0 %v238, 32
    %v243 = vpop.permute.xlu0 %242
    %244 = vrot.lane.b32.xlu0 %v239, 32
    %v245 = vpop.permute.xlu0 %244
    %v248 = vadd.f32 %v228, %v243
    %v249 = vadd.f32 %v229, %v245
    %v250 = vtanh.pop %v248
    %v251 = vtanh.pop %v249
    %254 = vrot.lane.b32.xlu0 %v250, 64
    %v255 = vpop.permute.xlu0 %254
    %256 = vrot.lane.b32.xlu0 %v251, 64
    %v257 = vpop.permute.xlu0 %256
    %v260 = vmul.f32 %v223, %v255
    %v261 = vmul.f32 %v225, %v257
    %v264 = vrot.slane %v261, 7
    %vm265 = vcmask 1041409
    %v266 = vsel %vm265, %v264, %v260
    %267 = vrot.lane.b32.xlu0 %v266, 32
    %v268 = vpop.permute.xlu0 %267
    %v269 = vsel %vm134, %v268, 0
    %271 = vmatprep.subr.mxu0 0.0
    %272 = vmatpush1.msra.mxu0 %v130
    %273 = vmatprep.subr.mxu0 0.0
    %274 = vmatpush1.msra.mxu0 %v131
    %275 = vmatprep.subr.mxu0 0.0
    %276 = vmatpush1.msra.mxu0 %v132
    %277 = vmatprep.subr.mxu0 0.0
    %278 = vmatpush1.msra.mxu0 %v133
    %279 = vmatprep.subr.mxu0 0.0
    %280 = vmatpush1.msra.mxu0 0.0
    %281 = vmatprep.subr.mxu0 0.0
    %282 = vmatpush1.msra.mxu0 0.0
    %283 = vmatprep.subr.mxu0 0.0
    %284 = vmatpush1.msra.mxu0 0.0
    %285 = vmatprep.subr.mxu0 0.0
    %286 = vmatpush1.msra.mxu0 0.0
    %287 = vmatprep.subr.mxu0 0.0
    %288 = vmatpush1.msra.mxu0 0.0
    %289 = vmatprep.subr.mxu0 0.0
    %290 = vmatpush1.msra.mxu0 0.0
    %291 = vmatprep.subr.mxu0 0.0
    %292 = vmatpush1.msra.mxu0 0.0
    %293 = vmatprep.subr.mxu0 0.0
    %294 = vmatpush1.msra.mxu0 0.0
    %295 = vmatprep.subr.mxu0 0.0
    %296 = vmatpush1.msra.mxu0 0.0
    %297 = vmatprep.subr.mxu0 0.0
    %298 = vmatpush1.msra.mxu0 0.0
    %299 = vmatprep.subr.mxu0 0.0
    %300 = vmatpush1.msra.mxu0 0.0
    %301 = vmatprep.subr.mxu0 0.0
    %302 = vmatpush1.msra.mxu0 0.0
    %303 = vmatprep.subr.mxu0 0.0
    %304 = vmatpush1.msra.mxu0 0.0
    %305 = vmatprep.subr.mxu0 0.0
    %306 = vmatpush1.msra.mxu0 0.0
    %307 = vmatprep.subr.mxu0 0.0
    %308 = vmatpush1.msra.mxu0 0.0
    %309 = vmatprep.subr.mxu0 0.0
    %310 = vmatpush1.msra.mxu0 0.0
    %311 = vmatprep.subr.mxu0 0.0
    %312 = vmatpush1.msra.mxu0 0.0
    %313 = vmatprep.subr.mxu0 0.0
    %314 = vmatpush1.msra.mxu0 0.0
    %315 = vmatprep.subr.mxu0 0.0
    %316 = vmatpush1.msra.mxu0 0.0
    %317 = vmatprep.subr.mxu0 0.0
    %318 = vmatpush1.msra.mxu0 0.0
    %319 = vmatprep.subr.mxu0 0.0
    %320 = vmatpush1.msra.mxu0 0.0
    %321 = vmatprep.subr.mxu0 0.0
    %322 = vmatpush1.msra.mxu0 0.0
    %323 = vmatprep.subr.mxu0 0.0
    %324 = vmatpush1.msra.mxu0 0.0
    %325 = vmatprep.subr.mxu0 0.0
    %326 = vmatpush1.msra.mxu0 0.0
    %327 = vmatprep.subr.mxu0 0.0
    %328 = vmatpush1.msra.mxu0 0.0
    %329 = vmatprep.subr.mxu0 0.0
    %330 = vmatpush1.msra.mxu0 0.0
    %331 = vmatprep.subr.mxu0 0.0
    %332 = vmatpush1.msra.mxu0 0.0
    %333 = vmatprep.subr.mxu0 0.0
    %334 = vmatpush1.msra.mxu0 0.0
    %335 = vmatprep.mubr.f32.mxu0 0.0
    %336 = vmatmul.mubr.f32.gmra.mrb[0].mxu0 %v269
    %v337 = vpop.f32.mrb[0].mxu0
    %v338 = vadd.f32 0.0, %v337
    %v339 = vpop.f32.mrb[0].mxu0
    %340 = vdwg.mxu0
    %v342 = vrot.slane %v338, 7
    %v345 = vadd.f32 %v128, %v342
    %v346 = vadd.f32 %v129, %v338
    %v347 = vxor.u32 %v345, 2147483648
    %v348 = vxor.u32 %v346, 2147483648
    %v349 = vmul.f32 %v347, 1.442695
    %v350 = vpow.pop %v349
    %v351 = vmul.f32 %v348, 1.442695
    %v352 = vpow.pop %v351
    %v353 = vadd.f32 %v350, 1.0
    %v354 = vadd.f32 %v352, 1.0
    %v355 = vrcp.pop %v353
    %v356 = vmul.f32 1.0, %v355
    %v357 = vrcp.pop %v354
    %v358 = vmul.f32 1.0, %v357
    %v359 = vtanh.pop %v345
    %v360 = vtanh.pop %v346
    %v363 = vrot.slane %v248, 7
    %v364 = vrot.slane %v249, 7
    %v367 = vmul.f32 %v356, %v363
    %v368 = vmul.f32 %v358, %v364
    %371 = vrot.lane.b32.xlu0 %v359, 64
    %v372 = vpop.permute.xlu0 %371
    %373 = vrot.lane.b32.xlu0 %v360, 64
    %v374 = vpop.permute.xlu0 %373
    %v377 = vmul.f32 %v356, %v372
    %v378 = vmul.f32 %v358, %v374
    %381 = vrot.lane.b32.xlu0 %v377, 32
    %v382 = vpop.permute.xlu0 %381
    %383 = vrot.lane.b32.xlu0 %v378, 32
    %v384 = vpop.permute.xlu0 %383
    %v387 = vadd.f32 %v367, %v382
    %v388 = vadd.f32 %v368, %v384
    %v389 = vtanh.pop %v387
    %v390 = vtanh.pop %v388
    %393 = vrot.lane.b32.xlu0 %v389, 64
    %v394 = vpop.permute.xlu0 %393
    %395 = vrot.lane.b32.xlu0 %v390, 64
    %v396 = vpop.permute.xlu0 %395
    %v399 = vmul.f32 %v356, %v394
    %v400 = vmul.f32 %v358, %v396
    %v403 = vrot.slane %v399, 1
    %v404 = vsel %vm265, %v400, %v403
    %405 = vrot.lane.b32.xlu0 %v404, 32
    %v406 = vpop.permute.xlu0 %405
    %v407 = vsel %vm134, %v406, 0
    %409 = vmatprep.subr.mxu0 0.0
    %410 = vmatpush1.msra.mxu0 %v130
    %411 = vmatprep.subr.mxu0 0.0
    %412 = vmatpush1.msra.mxu0 %v131
    %413 = vmatprep.subr.mxu0 0.0
    %414 = vmatpush1.msra.mxu0 %v132
    %415 = vmatprep.subr.mxu0 0.0
    %416 = vmatpush1.msra.mxu0 %v133
    %417 = vmatprep.subr.mxu0 0.0
    %418 = vmatpush1.msra.mxu0 0.0
    %419 = vmatprep.subr.mxu0 0.0
    %420 = vmatpush1.msra.mxu0 0.0
    %421 = vmatprep.subr.mxu0 0.0
    %422 = vmatpush1.msra.mxu0 0.0
    %423 = vmatprep.subr.mxu0 0.0
    %424 = vmatpush1.msra.mxu0 0.0
    %425 = vmatprep.subr.mxu0 0.0
    %426 = vmatpush1.msra.mxu0 0.0
    %427 = vmatprep.subr.mxu0 0.0
    %428 = vmatpush1.msra.mxu0 0.0
    %429 = vmatprep.subr.mxu0 0.0
    %430 = vmatpush1.msra.mxu0 0.0
    %431 = vmatprep.subr.mxu0 0.0
    %432 = vmatpush1.msra.mxu0 0.0
    %433 = vmatprep.subr.mxu0 0.0
    %434 = vmatpush1.msra.mxu0 0.0
    %435 = vmatprep.subr.mxu0 0.0
    %436 = vmatpush1.msra.mxu0 0.0
    %437 = vmatprep.subr.mxu0 0.0
    %438 = vmatpush1.msra.mxu0 0.0
    %439 = vmatprep.subr.mxu0 0.0
    %440 = vmatpush1.msra.mxu0 0.0
    %441 = vmatprep.subr.mxu0 0.0
    %442 = vmatpush1.msra.mxu0 0.0
    %443 = vmatprep.subr.mxu0 0.0
    %444 = vmatpush1.msra.mxu0 0.0
    %445 = vmatprep.subr.mxu0 0.0
    %446 = vmatpush1.msra.mxu0 0.0
    %447 = vmatprep.subr.mxu0 0.0
    %448 = vmatpush1.msra.mxu0 0.0
    %449 = vmatprep.subr.mxu0 0.0
    %450 = vmatpush1.msra.mxu0 0.0
    %451 = vmatprep.subr.mxu0 0.0
    %452 = vmatpush1.msra.mxu0 0.0
    %453 = vmatprep.subr.mxu0 0.0
    %454 = vmatpush1.msra.mxu0 0.0
    %455 = vmatprep.subr.mxu0 0.0
    %456 = vmatpush1.msra.mxu0 0.0
    %457 = vmatprep.subr.mxu0 0.0
    %458 = vmatpush1.msra.mxu0 0.0
    %459 = vmatprep.subr.mxu0 0.0
    %460 = vmatpush1.msra.mxu0 0.0
    %461 = vmatprep.subr.mxu0 0.0
    %462 = vmatpush1.msra.mxu0 0.0
    %463 = vmatprep.subr.mxu0 0.0
    %464 = vmatpush1.msra.mxu0 0.0
    %465 = vmatprep.subr.mxu0 0.0
    %466 = vmatpush1.msra.mxu0 0.0
    %467 = vmatprep.subr.mxu0 0.0
    %468 = vmatpush1.msra.mxu0 0.0
    %469 = vmatprep.subr.mxu0 0.0
    %470 = vmatpush1.msra.mxu0 0.0
    %471 = vmatprep.subr.mxu0 0.0
    %472 = vmatpush1.msra.mxu0 0.0
    %473 = vmatprep.mubr.f32.mxu0 0.0
    %474 = vmatmul.mubr.f32.gmra.mrb[0].mxu0 %v407
    %v475 = vpop.f32.mrb[0].mxu0
    %v476 = vadd.f32 0.0, %v475
    %v477 = vpop.f32.mrb[0].mxu0
    %478 = vdwg.mxu0
    %v480 = vrot.slane %v476, 6
    %v481 = vrot.slane %v476, 7
    %v484 = vadd.f32 %v128, %v480
    %v485 = vadd.f32 %v129, %v481
    %v486 = vxor.u32 %v484, 2147483648
    %v487 = vxor.u32 %v485, 2147483648
    %v488 = vmul.f32 %v486, 1.442695
    %v489 = vpow.pop %v488
    %v490 = vmul.f32 %v487, 1.442695
    %v491 = vpow.pop %v490
    %v492 = vadd.f32 %v489, 1.0
    %v493 = vadd.f32 %v491, 1.0
    %v494 = vrcp.pop %v492
    %v495 = vmul.f32 1.0, %v494
    %v496 = vrcp.pop %v493
    %v497 = vmul.f32 1.0, %v496
    %v498 = vtanh.pop %v484
    %v499 = vtanh.pop %v485
    %v502 = vrot.slane %v387, 7
    %v503 = vrot.slane %v388, 7
    %v506 = vmul.f32 %v495, %v502
    %v507 = vmul.f32 %v497, %v503
    %510 = vrot.lane.b32.xlu0 %v498, 64
    %v511 = vpop.permute.xlu0 %510
    %512 = vrot.lane.b32.xlu0 %v499, 64
    %v513 = vpop.permute.xlu0 %512
    %v516 = vmul.f32 %v495, %v511
    %v517 = vmul.f32 %v497, %v513
    %520 = vrot.lane.b32.xlu0 %v516, 32
    %v521 = vpop.permute.xlu0 %520
    %522 = vrot.lane.b32.xlu0 %v517, 32
    %v523 = vpop.permute.xlu0 %522
    %v526 = vadd.f32 %v506, %v521
    %v527 = vadd.f32 %v507, %v523
    %v528 = vtanh.pop %v526
    %v529 = vtanh.pop %v527
    %532 = vrot.lane.b32.xlu0 %v528, 64
    %v533 = vpop.permute.xlu0 %532
    %534 = vrot.lane.b32.xlu0 %v529, 64
    %v535 = vpop.permute.xlu0 %534
    %v538 = vmul.f32 %v495, %v533
    %v539 = vmul.f32 %v497, %v535
    %v542 = vrot.slane %v538, 2
    %v543 = vrot.slane %v539, 1
    %v544 = vsel %vm265, %v543, %v542
    %545 = vrot.lane.b32.xlu0 %v544, 32
    %v546 = vpop.permute.xlu0 %545
    %v547 = vsel %vm134, %v546, 0
    %549 = vmatprep.subr.mxu0 0.0
    %550 = vmatpush1.msra.mxu0 %v130
    %551 = vmatprep.subr.mxu0 0.0
    %552 = vmatpush1.msra.mxu0 %v131
    %553 = vmatprep.subr.mxu0 0.0
    %554 = vmatpush1.msra.mxu0 %v132
    %555 = vmatprep.subr.mxu0 0.0
    %556 = vmatpush1.msra.mxu0 %v133
    %557 = vmatprep.subr.mxu0 0.0
    %558 = vmatpush1.msra.mxu0 0.0
    %559 = vmatprep.subr.mxu0 0.0
    %560 = vmatpush1.msra.mxu0 0.0
    %561 = vmatprep.subr.mxu0 0.0
    %562 = vmatpush1.msra.mxu0 0.0
    %563 = vmatprep.subr.mxu0 0.0
    %564 = vmatpush1.msra.mxu0 0.0
    %565 = vmatprep.subr.mxu0 0.0
    %566 = vmatpush1.msra.mxu0 0.0
    %567 = vmatprep.subr.mxu0 0.0
    %568 = vmatpush1.msra.mxu0 0.0
    %569 = vmatprep.subr.mxu0 0.0
    %570 = vmatpush1.msra.mxu0 0.0
    %571 = vmatprep.subr.mxu0 0.0
    %572 = vmatpush1.msra.mxu0 0.0
    %573 = vmatprep.subr.mxu0 0.0
    %574 = vmatpush1.msra.mxu0 0.0
    %575 = vmatprep.subr.mxu0 0.0
    %576 = vmatpush1.msra.mxu0 0.0
    %577 = vmatprep.subr.mxu0 0.0
    %578 = vmatpush1.msra.mxu0 0.0
    %579 = vmatprep.subr.mxu0 0.0
    %580 = vmatpush1.msra.mxu0 0.0
    %581 = vmatprep.subr.mxu0 0.0
    %582 = vmatpush1.msra.mxu0 0.0
    %583 = vmatprep.subr.mxu0 0.0
    %584 = vmatpush1.msra.mxu0 0.0
    %585 = vmatprep.subr.mxu0 0.0
    %586 = vmatpush1.msra.mxu0 0.0
    %587 = vmatprep.subr.mxu0 0.0
    %588 = vmatpush1.msra.mxu0 0.0
    %589 = vmatprep.subr.mxu0 0.0
    %590 = vmatpush1.msra.mxu0 0.0
    %591 = vmatprep.subr.mxu0 0.0
    %592 = vmatpush1.msra.mxu0 0.0
    %593 = vmatprep.subr.mxu0 0.0
    %594 = vmatpush1.msra.mxu0 0.0
    %595 = vmatprep.subr.mxu0 0.0
    %596 = vmatpush1.msra.mxu0 0.0
    %597 = vmatprep.subr.mxu0 0.0
    %598 = vmatpush1.msra.mxu0 0.0
    %599 = vmatprep.subr.mxu0 0.0
    %600 = vmatpush1.msra.mxu0 0.0
    %601 = vmatprep.subr.mxu0 0.0
    %602 = vmatpush1.msra.mxu0 0.0
    %603 = vmatprep.subr.mxu0 0.0
    %604 = vmatpush1.msra.mxu0 0.0
    %605 = vmatprep.subr.mxu0 0.0
    %606 = vmatpush1.msra.mxu0 0.0
    %607 = vmatprep.subr.mxu0 0.0
    %608 = vmatpush1.msra.mxu0 0.0
    %609 = vmatprep.subr.mxu0 0.0
    %610 = vmatpush1.msra.mxu0 0.0
    %611 = vmatprep.subr.mxu0 0.0
    %612 = vmatpush1.msra.mxu0 0.0
    %613 = vmatprep.mubr.f32.mxu0 0.0
    %614 = vmatmul.mubr.f32.gmra.mrb[0].mxu0 %v547
    %v615 = vpop.f32.mrb[0].mxu0
    %v616 = vadd.f32 0.0, %v615
    %v617 = vpop.f32.mrb[0].mxu0
    %618 = vdwg.mxu0
    %v620 = vrot.slane %v616, 5
    %v621 = vrot.slane %v616, 6
    %v624 = vadd.f32 %v128, %v620
    %v625 = vadd.f32 %v129, %v621
    %v626 = vxor.u32 %v624, 2147483648
    %v627 = vxor.u32 %v625, 2147483648
    %v628 = vmul.f32 %v626, 1.442695
    %v629 = vpow.pop %v628
    %v630 = vmul.f32 %v627, 1.442695
    %v631 = vpow.pop %v630
    %v632 = vadd.f32 %v629, 1.0
    %v633 = vadd.f32 %v631, 1.0
    %v634 = vrcp.pop %v632
    %v635 = vmul.f32 1.0, %v634
    %v636 = vrcp.pop %v633
    %v637 = vmul.f32 1.0, %v636
    %v638 = vtanh.pop %v624
    %v639 = vtanh.pop %v625
    %v642 = vrot.slane %v526, 7
    %v643 = vrot.slane %v527, 7
    %v646 = vmul.f32 %v635, %v642
    %v647 = vmul.f32 %v637, %v643
    %650 = vrot.lane.b32.xlu0 %v638, 64
    %v651 = vpop.permute.xlu0 %650
    %652 = vrot.lane.b32.xlu0 %v639, 64
    %v653 = vpop.permute.xlu0 %652
    %v656 = vmul.f32 %v635, %v651
    %v657 = vmul.f32 %v637, %v653
    %660 = vrot.lane.b32.xlu0 %v656, 32
    %v661 = vpop.permute.xlu0 %660
    %662 = vrot.lane.b32.xlu0 %v657, 32
    %v663 = vpop.permute.xlu0 %662
    %v666 = vadd.f32 %v646, %v661
    %v667 = vadd.f32 %v647, %v663
    %v668 = vtanh.pop %v666
    %v669 = vtanh.pop %v667
    %672 = vrot.lane.b32.xlu0 %v668, 64
    %v673 = vpop.permute.xlu0 %672
    %674 = vrot.lane.b32.xlu0 %v669, 64
    %v675 = vpop.permute.xlu0 %674
    %v678 = vmul.f32 %v635, %v673
    %v679 = vmul.f32 %v637, %v675
    %v682 = vrot.slane %v678, 3
    %v683 = vrot.slane %v679, 2
    %v684 = vsel %vm265, %v683, %v682
    %685 = vrot.lane.b32.xlu0 %v684, 32
    %v686 = vpop.permute.xlu0 %685
    %v687 = vsel %vm134, %v686, 0
    %689 = vmatprep.subr.mxu0 0.0
    %690 = vmatpush1.msra.mxu0 %v130
    %691 = vmatprep.subr.mxu0 0.0
    %692 = vmatpush1.msra.mxu0 %v131
    %693 = vmatprep.subr.mxu0 0.0
    %694 = vmatpush1.msra.mxu0 %v132
    %695 = vmatprep.subr.mxu0 0.0
    %696 = vmatpush1.msra.mxu0 %v133
    %697 = vmatprep.subr.mxu0 0.0
    %698 = vmatpush1.msra.mxu0 0.0
    %699 = vmatprep.subr.mxu0 0.0
    %700 = vmatpush1.msra.mxu0 0.0
    %701 = vmatprep.subr.mxu0 0.0
    %702 = vmatpush1.msra.mxu0 0.0
    %703 = vmatprep.subr.mxu0 0.0
    %704 = vmatpush1.msra.mxu0 0.0
    %705 = vmatprep.subr.mxu0 0.0
    %706 = vmatpush1.msra.mxu0 0.0
    %707 = vmatprep.subr.mxu0 0.0
    %708 = vmatpush1.msra.mxu0 0.0
    %709 = vmatprep.subr.mxu0 0.0
    %710 = vmatpush1.msra.mxu0 0.0
    %711 = vmatprep.subr.mxu0 0.0
    %712 = vmatpush1.msra.mxu0 0.0
    %713 = vmatprep.subr.mxu0 0.0
    %714 = vmatpush1.msra.mxu0 0.0
    %715 = vmatprep.subr.mxu0 0.0
    %716 = vmatpush1.msra.mxu0 0.0
    %717 = vmatprep.subr.mxu0 0.0
    %718 = vmatpush1.msra.mxu0 0.0
    %719 = vmatprep.subr.mxu0 0.0
    %720 = vmatpush1.msra.mxu0 0.0
    %721 = vmatprep.subr.mxu0 0.0
    %722 = vmatpush1.msra.mxu0 0.0
    %723 = vmatprep.subr.mxu0 0.0
    %724 = vmatpush1.msra.mxu0 0.0
    %725 = vmatprep.subr.mxu0 0.0
    %726 = vmatpush1.msra.mxu0 0.0
    %727 = vmatprep.subr.mxu0 0.0
    %728 = vmatpush1.msra.mxu0 0.0
    %729 = vmatprep.subr.mxu0 0.0
    %730 = vmatpush1.msra.mxu0 0.0
    %731 = vmatprep.subr.mxu0 0.0
    %732 = vmatpush1.msra.mxu0 0.0
    %733 = vmatprep.subr.mxu0 0.0
    %734 = vmatpush1.msra.mxu0 0.0
    %735 = vmatprep.subr.mxu0 0.0
    %736 = vmatpush1.msra.mxu0 0.0
    %737 = vmatprep.subr.mxu0 0.0
    %738 = vmatpush1.msra.mxu0 0.0
    %739 = vmatprep.subr.mxu0 0.0
    %740 = vmatpush1.msra.mxu0 0.0
    %741 = vmatprep.subr.mxu0 0.0
    %742 = vmatpush1.msra.mxu0 0.0
    %743 = vmatprep.subr.mxu0 0.0
    %744 = vmatpush1.msra.mxu0 0.0
    %745 = vmatprep.subr.mxu0 0.0
    %746 = vmatpush1.msra.mxu0 0.0
    %747 = vmatprep.subr.mxu0 0.0
    %748 = vmatpush1.msra.mxu0 0.0
    %749 = vmatprep.subr.mxu0 0.0
    %750 = vmatpush1.msra.mxu0 0.0
    %751 = vmatprep.subr.mxu0 0.0
    %752 = vmatpush1.msra.mxu0 0.0
    %753 = vmatprep.mubr.f32.mxu0 0.0
    %754 = vmatmul.mubr.f32.gmra.mrb[0].mxu0 %v687
    %v755 = vpop.f32.mrb[0].mxu0
    %v756 = vadd.f32 0.0, %v755
    %v757 = vpop.f32.mrb[0].mxu0
    %758 = vdwg.mxu0
    %v760 = vrot.slane %v756, 4
    %v761 = vrot.slane %v756, 5
    %v764 = vadd.f32 %v128, %v760
    %v765 = vadd.f32 %v129, %v761
    %v766 = vxor.u32 %v764, 2147483648
    %v767 = vxor.u32 %v765, 2147483648
    %v768 = vmul.f32 %v766, 1.442695
    %v769 = vpow.pop %v768
    %v770 = vmul.f32 %v767, 1.442695
    %v771 = vpow.pop %v770
    %v772 = vadd.f32 %v769, 1.0
    %v773 = vadd.f32 %v771, 1.0
    %v774 = vrcp.pop %v772
    %v775 = vmul.f32 1.0, %v774
    %v776 = vrcp.pop %v773
    %v777 = vmul.f32 1.0, %v776
    %v778 = vtanh.pop %v764
    %v779 = vtanh.pop %v765
    %v782 = vrot.slane %v666, 7
    %v783 = vrot.slane %v667, 7
    %v786 = vmul.f32 %v775, %v782
    %v787 = vmul.f32 %v777, %v783
    %790 = vrot.lane.b32.xlu0 %v778, 64
    %v791 = vpop.permute.xlu0 %790
    %792 = vrot.lane.b32.xlu0 %v779, 64
    %v793 = vpop.permute.xlu0 %792
    %v796 = vmul.f32 %v775, %v791
    %v797 = vmul.f32 %v777, %v793
    %800 = vrot.lane.b32.xlu0 %v796, 32
    %v801 = vpop.permute.xlu0 %800
    %802 = vrot.lane.b32.xlu0 %v797, 32
    %v803 = vpop.permute.xlu0 %802
    %v806 = vadd.f32 %v786, %v801
    %v807 = vadd.f32 %v787, %v803
    %v808 = vtanh.pop %v806
    %v809 = vtanh.pop %v807
    %812 = vrot.lane.b32.xlu0 %v808, 64
    %v813 = vpop.permute.xlu0 %812
    %814 = vrot.lane.b32.xlu0 %v809, 64
    %v815 = vpop.permute.xlu0 %814
    %v818 = vmul.f32 %v775, %v813
    %v819 = vmul.f32 %v777, %v815
    %v822 = vrot.slane %v818, 4
    %v823 = vrot.slane %v819, 3
    %v824 = vsel %vm265, %v823, %v822
    %825 = vrot.lane.b32.xlu0 %v824, 32
    %v826 = vpop.permute.xlu0 %825
    %v827 = vsel %vm134, %v826, 0
    %829 = vmatprep.subr.mxu0 0.0
    %830 = vmatpush1.msra.mxu0 %v130
    %831 = vmatprep.subr.mxu0 0.0
    %832 = vmatpush1.msra.mxu0 %v131
    %833 = vmatprep.subr.mxu0 0.0
    %834 = vmatpush1.msra.mxu0 %v132
    %835 = vmatprep.subr.mxu0 0.0
    %836 = vmatpush1.msra.mxu0 %v133
    %837 = vmatprep.subr.mxu0 0.0
    %838 = vmatpush1.msra.mxu0 0.0
    %839 = vmatprep.subr.mxu0 0.0
    %840 = vmatpush1.msra.mxu0 0.0
    %841 = vmatprep.subr.mxu0 0.0
    %842 = vmatpush1.msra.mxu0 0.0
    %843 = vmatprep.subr.mxu0 0.0
    %844 = vmatpush1.msra.mxu0 0.0
    %845 = vmatprep.subr.mxu0 0.0
    %846 = vmatpush1.msra.mxu0 0.0
    %847 = vmatprep.subr.mxu0 0.0
    %848 = vmatpush1.msra.mxu0 0.0
    %849 = vmatprep.subr.mxu0 0.0
    %850 = vmatpush1.msra.mxu0 0.0
    %851 = vmatprep.subr.mxu0 0.0
    %852 = vmatpush1.msra.mxu0 0.0
    %853 = vmatprep.subr.mxu0 0.0
    %854 = vmatpush1.msra.mxu0 0.0
    %855 = vmatprep.subr.mxu0 0.0
    %856 = vmatpush1.msra.mxu0 0.0
    %857 = vmatprep.subr.mxu0 0.0
    %858 = vmatpush1.msra.mxu0 0.0
    %859 = vmatprep.subr.mxu0 0.0
    %860 = vmatpush1.msra.mxu0 0.0
    %861 = vmatprep.subr.mxu0 0.0
    %862 = vmatpush1.msra.mxu0 0.0
    %863 = vmatprep.subr.mxu0 0.0
    %864 = vmatpush1.msra.mxu0 0.0
    %865 = vmatprep.subr.mxu0 0.0
    %866 = vmatpush1.msra.mxu0 0.0
    %867 = vmatprep.subr.mxu0 0.0
    %868 = vmatpush1.msra.mxu0 0.0
    %869 = vmatprep.subr.mxu0 0.0
    %870 = vmatpush1.msra.mxu0 0.0
    %871 = vmatprep.subr.mxu0 0.0
    %872 = vmatpush1.msra.mxu0 0.0
    %873 = vmatprep.subr.mxu0 0.0
    %874 = vmatpush1.msra.mxu0 0.0
    %875 = vmatprep.subr.mxu0 0.0
    %876 = vmatpush1.msra.mxu0 0.0
    %877 = vmatprep.subr.mxu0 0.0
    %878 = vmatpush1.msra.mxu0 0.0
    %879 = vmatprep.subr.mxu0 0.0
    %880 = vmatpush1.msra.mxu0 0.0
    %881 = vmatprep.subr.mxu0 0.0
    %882 = vmatpush1.msra.mxu0 0.0
    %883 = vmatprep.subr.mxu0 0.0
    %884 = vmatpush1.msra.mxu0 0.0
    %885 = vmatprep.subr.mxu0 0.0
    %886 = vmatpush1.msra.mxu0 0.0
    %887 = vmatprep.subr.mxu0 0.0
    %888 = vmatpush1.msra.mxu0 0.0
    %889 = vmatprep.subr.mxu0 0.0
    %890 = vmatpush1.msra.mxu0 0.0
    %891 = vmatprep.subr.mxu0 0.0
    %892 = vmatpush1.msra.mxu0 0.0
    %893 = vmatprep.mubr.f32.mxu0 0.0
    %894 = vmatmul.mubr.f32.gmra.mrb[0].mxu0 %v827
    %v895 = vpop.f32.mrb[0].mxu0
    %v896 = vadd.f32 0.0, %v895
    %v897 = vpop.f32.mrb[0].mxu0
    %898 = vdwg.mxu0
    %v900 = vrot.slane %v896, 3
    %v901 = vrot.slane %v896, 4
    %v904 = vadd.f32 %v128, %v900
    %v905 = vadd.f32 %v129, %v901
    %v906 = vxor.u32 %v904, 2147483648
    %v907 = vxor.u32 %v905, 2147483648
    %v908 = vmul.f32 %v906, 1.442695
    %v909 = vpow.pop %v908
    %v910 = vmul.f32 %v907, 1.442695
    %v911 = vpow.pop %v910
    %v912 = vadd.f32 %v909, 1.0
    %v913 = vadd.f32 %v911, 1.0
    %v914 = vrcp.pop %v912
    %v915 = vmul.f32 1.0, %v914
    %v916 = vrcp.pop %v913
    %v917 = vmul.f32 1.0, %v916
    %v918 = vtanh.pop %v904
    %v919 = vtanh.pop %v905
    %v922 = vrot.slane %v806, 7
    %v923 = vrot.slane %v807, 7
    %v926 = vmul.f32 %v915, %v922
    %v927 = vmul.f32 %v917, %v923
    %930 = vrot.lane.b32.xlu0 %v918, 64
    %v931 = vpop.permute.xlu0 %930
    %932 = vrot.lane.b32.xlu0 %v919, 64
    %v933 = vpop.permute.xlu0 %932
    %v936 = vmul.f32 %v915, %v931
    %v937 = vmul.f32 %v917, %v933
    %940 = vrot.lane.b32.xlu0 %v936, 32
    %v941 = vpop.permute.xlu0 %940
    %942 = vrot.lane.b32.xlu0 %v937, 32
    %v943 = vpop.permute.xlu0 %942
    %v946 = vadd.f32 %v926, %v941
    %v947 = vadd.f32 %v927, %v943
    %v948 = vtanh.pop %v946
    %v949 = vtanh.pop %v947
    %952 = vrot.lane.b32.xlu0 %v948, 64
    %v953 = vpop.permute.xlu0 %952
    %954 = vrot.lane.b32.xlu0 %v949, 64
    %v955 = vpop.permute.xlu0 %954
    %v958 = vmul.f32 %v915, %v953
    %v959 = vmul.f32 %v917, %v955
    %v962 = vrot.slane %v958, 5
    %v963 = vrot.slane %v959, 4
    %v964 = vsel %vm265, %v963, %v962
    %965 = vrot.lane.b32.xlu0 %v964, 32
    %v966 = vpop.permute.xlu0 %965
    %v967 = vsel %vm134, %v966, 0
    %969 = vmatprep.subr.mxu0 0.0
    %970 = vmatpush1.msra.mxu0 %v130
    %971 = vmatprep.subr.mxu0 0.0
    %972 = vmatpush1.msra.mxu0 %v131
    %973 = vmatprep.subr.mxu0 0.0
    %974 = vmatpush1.msra.mxu0 %v132
    %975 = vmatprep.subr.mxu0 0.0
    %976 = vmatpush1.msra.mxu0 %v133
    %977 = vmatprep.subr.mxu0 0.0
    %978 = vmatpush1.msra.mxu0 0.0
    %979 = vmatprep.subr.mxu0 0.0
    %980 = vmatpush1.msra.mxu0 0.0
    %981 = vmatprep.subr.mxu0 0.0
    %982 = vmatpush1.msra.mxu0 0.0
    %983 = vmatprep.subr.mxu0 0.0
    %984 = vmatpush1.msra.mxu0 0.0
    %985 = vmatprep.subr.mxu0 0.0
    %986 = vmatpush1.msra.mxu0 0.0
    %987 = vmatprep.subr.mxu0 0.0
    %988 = vmatpush1.msra.mxu0 0.0
    %989 = vmatprep.subr.mxu0 0.0
    %990 = vmatpush1.msra.mxu0 0.0
    %991 = vmatprep.subr.mxu0 0.0
    %992 = vmatpush1.msra.mxu0 0.0
    %993 = vmatprep.subr.mxu0 0.0
    %994 = vmatpush1.msra.mxu0 0.0
    %995 = vmatprep.subr.mxu0 0.0
    %996 = vmatpush1.msra.mxu0 0.0
    %997 = vmatprep.subr.mxu0 0.0
    %998 = vmatpush1.msra.mxu0 0.0
    %999 = vmatprep.subr.mxu0 0.0
    %1000 = vmatpush1.msra.mxu0 0.0
    %1001 = vmatprep.subr.mxu0 0.0
    %1002 = vmatpush1.msra.mxu0 0.0
    %1003 = vmatprep.subr.mxu0 0.0
    %1004 = vmatpush1.msra.mxu0 0.0
    %1005 = vmatprep.subr.mxu0 0.0
    %1006 = vmatpush1.msra.mxu0 0.0
    %1007 = vmatprep.subr.mxu0 0.0
    %1008 = vmatpush1.msra.mxu0 0.0
    %1009 = vmatprep.subr.mxu0 0.0
    %1010 = vmatpush1.msra.mxu0 0.0
    %1011 = vmatprep.subr.mxu0 0.0
    %1012 = vmatpush1.msra.mxu0 0.0
    %1013 = vmatprep.subr.mxu0 0.0
    %1014 = vmatpush1.msra.mxu0 0.0
    %1015 = vmatprep.subr.mxu0 0.0
    %1016 = vmatpush1.msra.mxu0 0.0
    %1017 = vmatprep.subr.mxu0 0.0
    %1018 = vmatpush1.msra.mxu0 0.0
    %1019 = vmatprep.subr.mxu0 0.0
    %1020 = vmatpush1.msra.mxu0 0.0
    %1021 = vmatprep.subr.mxu0 0.0
    %1022 = vmatpush1.msra.mxu0 0.0
    %1023 = vmatprep.subr.mxu0 0.0
    %1024 = vmatpush1.msra.mxu0 0.0
    %1025 = vmatprep.subr.mxu0 0.0
    %1026 = vmatpush1.msra.mxu0 0.0
    %1027 = vmatprep.subr.mxu0 0.0
    %1028 = vmatpush1.msra.mxu0 0.0
    %1029 = vmatprep.subr.mxu0 0.0
    %1030 = vmatpush1.msra.mxu0 0.0
    %1031 = vmatprep.subr.mxu0 0.0
    %1032 = vmatpush1.msra.mxu0 0.0
    %1033 = vmatprep.mubr.f32.mxu0 0.0
    %1034 = vmatmul.mubr.f32.gmra.mrb[0].mxu0 %v967
    %v1035 = vpop.f32.mrb[0].mxu0
    %v1036 = vadd.f32 0.0, %v1035
    %v1037 = vpop.f32.mrb[0].mxu0
    %1038 = vdwg.mxu0
    %v1040 = vrot.slane %v1036, 2
    %v1041 = vrot.slane %v1036, 3
    %v1044 = vadd.f32 %v128, %v1040
    %v1045 = vadd.f32 %v129, %v1041
    %v1046 = vxor.u32 %v1044, 2147483648
    %v1047 = vxor.u32 %v1045, 2147483648
    %v1048 = vmul.f32 %v1046, 1.442695
    %v1049 = vpow.pop %v1048
    %v1050 = vmul.f32 %v1047, 1.442695
    %v1051 = vpow.pop %v1050
    %v1052 = vadd.f32 %v1049, 1.0
    %v1053 = vadd.f32 %v1051, 1.0
    %v1054 = vrcp.pop %v1052
    %v1055 = vmul.f32 1.0, %v1054
    %v1056 = vrcp.pop %v1053
    %v1057 = vmul.f32 1.0, %v1056
    %v1058 = vtanh.pop %v1044
    %v1059 = vtanh.pop %v1045
    %v1062 = vrot.slane %v946, 7
    %v1063 = vrot.slane %v947, 7
    %v1066 = vmul.f32 %v1055, %v1062
    %v1067 = vmul.f32 %v1057, %v1063
    %1070 = vrot.lane.b32.xlu0 %v1058, 64
    %v1071 = vpop.permute.xlu0 %1070
    %1072 = vrot.lane.b32.xlu0 %v1059, 64
    %v1073 = vpop.permute.xlu0 %1072
    %v1076 = vmul.f32 %v1055, %v1071
    %v1077 = vmul.f32 %v1057, %v1073
    %1080 = vrot.lane.b32.xlu0 %v1076, 32
    %v1081 = vpop.permute.xlu0 %1080
    %1082 = vrot.lane.b32.xlu0 %v1077, 32
    %v1083 = vpop.permute.xlu0 %1082
    %v1086 = vadd.f32 %v1066, %v1081
    %v1087 = vadd.f32 %v1067, %v1083
    %v1088 = vtanh.pop %v1086
    %v1089 = vtanh.pop %v1087
    %1092 = vrot.lane.b32.xlu0 %v1088, 64
    %v1093 = vpop.permute.xlu0 %1092
    %1094 = vrot.lane.b32.xlu0 %v1089, 64
    %v1095 = vpop.permute.xlu0 %1094
    %v1098 = vmul.f32 %v1055, %v1093
    %v1099 = vmul.f32 %v1057, %v1095
    %v1102 = vrot.slane %v1098, 6
    %v1103 = vrot.slane %v1099, 5
    %v1104 = vsel %vm265, %v1103, %v1102
    %1105 = vrot.lane.b32.xlu0 %v1104, 32
    %v1106 = vpop.permute.xlu0 %1105
    %v1107 = vsel %vm134, %v1106, 0
    %1109 = vmatprep.subr.mxu0 0.0
    %1110 = vmatpush1.msra.mxu0 %v130
    %1111 = vmatprep.subr.mxu0 0.0
    %1112 = vmatpush1.msra.mxu0 %v131
    %1113 = vmatprep.subr.mxu0 0.0
    %1114 = vmatpush1.msra.mxu0 %v132
    %1115 = vmatprep.subr.mxu0 0.0
    %1116 = vmatpush1.msra.mxu0 %v133
    %1117 = vmatprep.subr.mxu0 0.0
    %1118 = vmatpush1.msra.mxu0 0.0
    %1119 = vmatprep.subr.mxu0 0.0
    %1120 = vmatpush1.msra.mxu0 0.0
    %1121 = vmatprep.subr.mxu0 0.0
    %1122 = vmatpush1.msra.mxu0 0.0
    %1123 = vmatprep.subr.mxu0 0.0
    %1124 = vmatpush1.msra.mxu0 0.0
    %1125 = vmatprep.subr.mxu0 0.0
    %1126 = vmatpush1.msra.mxu0 0.0
    %1127 = vmatprep.subr.mxu0 0.0
    %1128 = vmatpush1.msra.mxu0 0.0
    %1129 = vmatprep.subr.mxu0 0.0
    %1130 = vmatpush1.msra.mxu0 0.0
    %1131 = vmatprep.subr.mxu0 0.0
    %1132 = vmatpush1.msra.mxu0 0.0
    %1133 = vmatprep.subr.mxu0 0.0
    %1134 = vmatpush1.msra.mxu0 0.0
    %1135 = vmatprep.subr.mxu0 0.0
    %1136 = vmatpush1.msra.mxu0 0.0
    %1137 = vmatprep.subr.mxu0 0.0
    %1138 = vmatpush1.msra.mxu0 0.0
    %1139 = vmatprep.subr.mxu0 0.0
    %1140 = vmatpush1.msra.mxu0 0.0
    %1141 = vmatprep.subr.mxu0 0.0
    %1142 = vmatpush1.msra.mxu0 0.0
    %1143 = vmatprep.subr.mxu0 0.0
    %1144 = vmatpush1.msra.mxu0 0.0
    %1145 = vmatprep.subr.mxu0 0.0
    %1146 = vmatpush1.msra.mxu0 0.0
    %1147 = vmatprep.subr.mxu0 0.0
    %1148 = vmatpush1.msra.mxu0 0.0
    %1149 = vmatprep.subr.mxu0 0.0
    %1150 = vmatpush1.msra.mxu0 0.0
    %1151 = vmatprep.subr.mxu0 0.0
    %1152 = vmatpush1.msra.mxu0 0.0
    %1153 = vmatprep.subr.mxu0 0.0
    %1154 = vmatpush1.msra.mxu0 0.0
    %1155 = vmatprep.subr.mxu0 0.0
    %1156 = vmatpush1.msra.mxu0 0.0
    %1157 = vmatprep.subr.mxu0 0.0
    %1158 = vmatpush1.msra.mxu0 0.0
    %1159 = vmatprep.subr.mxu0 0.0
    %1160 = vmatpush1.msra.mxu0 0.0
    %1161 = vmatprep.subr.mxu0 0.0
    %1162 = vmatpush1.msra.mxu0 0.0
    %1163 = vmatprep.subr.mxu0 0.0
    %1164 = vmatpush1.msra.mxu0 0.0
    %1165 = vmatprep.subr.mxu0 0.0
    %1166 = vmatpush1.msra.mxu0 0.0
    %1167 = vmatprep.subr.mxu0 0.0
    %1168 = vmatpush1.msra.mxu0 0.0
    %1169 = vmatprep.subr.mxu0 0.0
    %1170 = vmatpush1.msra.mxu0 0.0
    %1171 = vmatprep.subr.mxu0 0.0
    %1172 = vmatpush1.msra.mxu0 0.0
    %1173 = vmatprep.mubr.f32.mxu0 0.0
    %1174 = vmatmul.mubr.f32.gmra.mrb[0].mxu0 %v1107
    %v1175 = vpop.f32.mrb[0].mxu0
    %v1176 = vadd.f32 0.0, %v1175
    %v1177 = vpop.f32.mrb[0].mxu0
    %1178 = vdwg.mxu0
    %v1180 = vrot.slane %v1176, 1
    %v1181 = vrot.slane %v1176, 2
    %v1184 = vadd.f32 %v128, %v1180
    %v1185 = vadd.f32 %v129, %v1181
    %v1186 = vxor.u32 %v1184, 2147483648
    %v1187 = vxor.u32 %v1185, 2147483648
    %v1188 = vmul.f32 %v1186, 1.442695
    %v1189 = vpow.pop %v1188
    %v1190 = vmul.f32 %v1187, 1.442695
    %v1191 = vpow.pop %v1190
    %v1192 = vadd.f32 %v1189, 1.0
    %v1193 = vadd.f32 %v1191, 1.0
    %v1194 = vrcp.pop %v1192
    %v1195 = vmul.f32 1.0, %v1194
    %v1196 = vrcp.pop %v1193
    %v1197 = vmul.f32 1.0, %v1196
    %v1198 = vtanh.pop %v1184
    %v1199 = vtanh.pop %v1185
    %v1202 = vrot.slane %v1086, 7
    %v1203 = vrot.slane %v1087, 7
    %v1206 = vmul.f32 %v1195, %v1202
    %v1207 = vmul.f32 %v1197, %v1203
    %1210 = vrot.lane.b32.xlu0 %v1198, 64
    %v1211 = vpop.permute.xlu0 %1210
    %1212 = vrot.lane.b32.xlu0 %v1199, 64
    %v1213 = vpop.permute.xlu0 %1212
    %v1216 = vmul.f32 %v1195, %v1211
    %v1217 = vmul.f32 %v1197, %v1213
    %1220 = vrot.lane.b32.xlu0 %v1216, 32
    %v1221 = vpop.permute.xlu0 %1220
    %1222 = vrot.lane.b32.xlu0 %v1217, 32
    %v1223 = vpop.permute.xlu0 %1222
    %v1226 = vadd.f32 %v1206, %v1221
    %v1227 = vadd.f32 %v1207, %v1223
    %v1228 = vtanh.pop %v1226
    %v1229 = vtanh.pop %v1227
    %1232 = vrot.lane.b32.xlu0 %v1228, 64
    %v1233 = vpop.permute.xlu0 %1232
    %1234 = vrot.lane.b32.xlu0 %v1229, 64
    %v1235 = vpop.permute.xlu0 %1234
    %v1238 = vmul.f32 %v1195, %v1233
    %v1239 = vmul.f32 %v1197, %v1235
    %v1242 = vrot.slane %v1239, 7
    %1243 = vrot.lane.b32.xlu0 %v1238, 32
    %v1244 = vpop.permute.xlu0 %1243
    %1245 = vrot.lane.b32.xlu0 %v1242, 32
    %v1246 = vpop.permute.xlu0 %1245
    %vm1249 = vcmask 261127
    %1250 = vst.msk [vmem:[#allocation5 - $0x7] sm:$0x80] %vm1249, %v1244
    %vm1251 = vcmask 253952
    %1252 = vst.msk [vmem:[#allocation5 + $0x1] sm:$0x1] %vm1251, %v1246
    // Predicated region
    $region22: #{tpu_custom_call.1} parent=1 // pred_check
      _
    $region23: #{tpu_custom_call.1} parent=1 // pred_check_branch
      %1254 = sbr.rel (0) target = $region25
    $region24: #{tpu_custom_call.1} parent=1 // pred_region
      %s1256 = ssub.s32 32, 32
      %1257 = vsyncadd [#allocation4], %s1256
      %s1259 = sshll.u32 [#allocation5], 4
      %s1260 = int_to_ptr.vmem [resolvable:$true] %s1259
      %1262 = dma.vmem_to_hbm [thread:$0]  %s1260, 32, %s4, [#allocation4]
    $region25: #{tpu_custom_call.1} parent=1 // pred_fallthru
      _
    // Predicated region
    $region26: #{tpu_custom_call.1} parent=1 // pred_check
      _
    $region27: #{tpu_custom_call.1} parent=1 // pred_check_branch
      %1264 = sbr.rel (0) target = $region29
    $region28: #{tpu_custom_call.1} parent=1 // pred_region
      %1265 = dma.done [#allocation4], 32
    $region29: #{tpu_custom_call.1} parent=1 // pred_fallthru
      _
    %1266 = vsyncpa [#allocation3], 1
    %1267 = vsyncpa [#allocation4], 1

</llo_original>
